<compile_context>
chip_gen: v5e
topology: v5e:2x2
jax: 0.10.0
libtpu: 0.0.40
codegen_flags: <defaults>
</compile_context>

<pallas_src>
import jax
import jax.numpy as jnp
from jax.experimental import pallas as pl
from jax.experimental.pallas import tpu as pltpu

_SUBLANE = 8
_V5E_SCOPED_VMEM_DEFAULT = 16 << 20  # smallest scoped-VMEM default of v5e/v6e/v7x


def _round_up(n, m):
    return ((n + m - 1) // m) * m


def _mlp_kernel(x_ref, w1_ref, b1_ref, w2_ref, b2_ref, o_ref):
    # fc1: [Bt, In] @ [In, H] on the MXU, f32 accumulation.
    h = jnp.dot(x_ref[...], w1_ref[...], preferred_element_type=jnp.float32)
    # Bias + ReLU in float32 on the VPU (safe on v5e, cheap everywhere).
    h = jnp.maximum(h + b1_ref[...], 0.0)
    # fc2: [Bt, H] @ [H, Out], f32 accumulation, cast once on the way out.
    y = jnp.dot(h.astype(w2_ref.dtype), w2_ref[...],
                preferred_element_type=jnp.float32)
    o_ref[...] = (y + b2_ref[...]).astype(o_ref.dtype)


def _cost_estimate(B, In, H, Out, mm_bytes, out_bytes):
    flops = 2 * B * (In * H + H * Out)
    bytes_accessed = (B * In * mm_bytes            # x
                      + In * H * mm_bytes + H * 4  # w1, b1
                      + H * Out * mm_bytes + Out * 4  # w2, b2
                      + B * Out * out_bytes)       # out
    return pl.CostEstimate(flops=flops, transcendentals=0,
                           bytes_accessed=bytes_accessed)


def regression_model_forward(x, w1, b1, w2, b2, *, b_tile=512,
                             compute_dtype=None):
    """Fused fc1 -> ReLU -> fc2.

    x:  [B, In];  w1: [In, H];  b1: [H];  w2: [H, Out];  b2: [Out].
    compute_dtype: optional matmul-operand dtype (e.g. jnp.bfloat16); bias add,
    ReLU and accumulation stay in float32; output keeps x.dtype.
    """
    B, In = x.shape
    H = w1.shape[1]
    Out = w2.shape[1]
    out_dtype = x.dtype
    mm_dtype = jnp.dtype(compute_dtype) if compute_dtype is not None else x.dtype
    mm_bytes = jnp.dtype(mm_dtype).itemsize
    out_bytes = jnp.dtype(out_dtype).itemsize

    # Operand prep (no HBM padding; casts are no-ops when dtypes already match).
    # Callers on the hot path should pre-cast weights to compute_dtype once.
    x_in = x.astype(mm_dtype)
    w1_in = w1.astype(mm_dtype)
    w2_in = w2.astype(mm_dtype)
    b1_in = b1.reshape(1, H).astype(jnp.float32)
    b2_in = b2.reshape(1, Out).astype(jnp.float32)

    cost = _cost_estimate(B, In, H, Out, mm_bytes, out_bytes)

    b_tile = max(_SUBLANE, _round_up(int(b_tile), _SUBLANE))

    if B <= b_tile:
        # Tiny batch: grid-less call, every operand fully VMEM-resident,
        # no pipeline prologue/epilogue, no double buffering.
        vmem = pl.BlockSpec(memory_space=pltpu.MemorySpace.VMEM)
        out = pl.pallas_call(
            _mlp_kernel,
            out_shape=jax.ShapeDtypeStruct((B, Out), out_dtype),
            in_specs=[vmem, vmem, vmem, vmem, vmem],
            out_specs=vmem,
            cost_estimate=cost,
        )(x_in, w1_in, b1_in, w2_in, b2_in)
    else:
        # Production batch: block B over a "parallel" grid axis (shards across
        # TensorCores on v7x); weights/biases use constant index_maps so they
        # are DMA'd once and stay VMEM-resident while x / out stream through.
        # Ragged last block (B % b_tile != 0) is masked by Pallas.
        grid = pl.cdiv(B, b_tile)  # B > b_tile  =>  grid >= 2

        # VMEM footprint estimate: double-buffered streamed blocks, resident
        # (double-buffered) weights/biases, f32 intermediates, 50% headroom.
        est = 2 * b_tile * (In * mm_bytes + Out * out_bytes)
        est += 2 * ((In * H + H * Out) * mm_bytes + (H + Out) * 4)
        est += b_tile * (H + Out) * 4
        est = int(est * 1.5)
        cp_kwargs = dict(dimension_semantics=("parallel",))
        if est > _V5E_SCOPED_VMEM_DEFAULT:
            cp_kwargs["vmem_limit_bytes"] = est

        out = pl.pallas_call(
            _mlp_kernel,
            out_shape=jax.ShapeDtypeStruct((B, Out), out_dtype),
            grid=(grid,),
            in_specs=[
                pl.BlockSpec((b_tile, In), lambda i: (i, 0)),
                pl.BlockSpec((In, H), lambda i: (0, 0)),
                pl.BlockSpec((1, H), lambda i: (0, 0)),
                pl.BlockSpec((H, Out), lambda i: (0, 0)),
                pl.BlockSpec((1, Out), lambda i: (0, 0)),
            ],
            out_specs=pl.BlockSpec((b_tile, Out), lambda i: (i, 0)),
            compiler_params=pltpu.CompilerParams(**cp_kwargs),
            cost_estimate=cost,
        )(x_in, w1_in, b1_in, w2_in, b2_in)

    return out


if __name__ == "__main__":
    # Shapes implied by the module: x [batch, input_size].
    batch, input_size, hidden_size, output_size = 8, 32, 64, 16

    key = jax.random.PRNGKey(0)
    kx, kw1, kb1, kw2, kb2 = jax.random.split(key, 5)

    x = jax.random.normal(kx, (batch, input_size), dtype=jnp.float32)
    lim1 = 1.0 / (input_size ** 0.5)
    lim2 = 1.0 / (hidden_size ** 0.5)
    w1 = jax.random.uniform(kw1, (input_size, hidden_size), jnp.float32, -lim1, lim1)
    b1 = jax.random.uniform(kb1, (hidden_size,), jnp.float32, -lim1, lim1)
    w2 = jax.random.uniform(kw2, (hidden_size, output_size), jnp.float32, -lim2, lim2)
    b2 = jax.random.uniform(kb2, (output_size,), jnp.float32, -lim2, lim2)

    ref = jnp.maximum(x @ w1 + b1, 0.0) @ w2 + b2

    # Path 1: tiny batch, grid-less kernel, f32 (bit-parity with PyTorch ref).
    out = regression_model_forward(x, w1, b1, w2, b2)
    jax.block_until_ready(out)
    assert out.shape == (batch, output_size)
    assert jnp.allclose(out, ref, atol=1e-5, rtol=1e-5)

    # Path 2: blocked-batch ("parallel" grid) path with a small tile and a
    # ragged last block (grid = cdiv(20, 8) = 3, last block only 4 real rows).
    x_big = jax.random.normal(jax.random.PRNGKey(1), (20, input_size), jnp.float32)
    out_big = regression_model_forward(x_big, w1, b1, w2, b2, b_tile=8)
    jax.block_until_ready(out_big)
    ref_big = jnp.maximum(x_big @ w1 + b1, 0.0) @ w2 + b2
    assert out_big.shape == (20, output_size)
    assert jnp.allclose(out_big, ref_big, atol=1e-5, rtol=1e-5)

    # Path 3: bf16 matmul operands (f32 accumulation) — the recommended
    # mem-bound configuration on v5e/v6e/v7x; looser tolerance vs f32 ref.
    out_bf16 = regression_model_forward(x, w1, b1, w2, b2,
                                        compute_dtype=jnp.bfloat16)
    jax.block_until_ready(out_bf16)
    assert out_bf16.shape == (batch, output_size)
    assert jnp.allclose(out_bf16, ref, atol=5e-2, rtol=5e-2)

    print("KERNEL_OK")
</pallas_src>

<mosaic_0001>
module attributes {stable_mosaic.version = 11 : i64} {
  func.func @_mlp_kernel(%arg0: memref<8x32xf32, #tpu.memory_space<vmem>>, %arg1: memref<32x64xf32, #tpu.memory_space<vmem>>, %arg2: memref<1x64xf32, #tpu.memory_space<vmem>>, %arg3: memref<64x16xf32, #tpu.memory_space<vmem>>, %arg4: memref<1x16xf32, #tpu.memory_space<vmem>>, %arg5: memref<8x16xf32, #tpu.memory_space<vmem>>) attributes {dimension_semantics = [], scalar_prefetch = 0 : i64, scratch_operands = 0 : i64, tpu.core_type = #tpu.core_type<tc>} {
    %c0 = arith.constant 0 : index
    %c0_0 = arith.constant 0 : index
    %0 = vector.load %arg0[%c0, %c0_0] : memref<8x32xf32, #tpu.memory_space<vmem>>, vector<8x32xf32>
    %c0_1 = arith.constant 0 : index
    %c0_2 = arith.constant 0 : index
    %1 = vector.load %arg1[%c0_1, %c0_2] : memref<32x64xf32, #tpu.memory_space<vmem>>, vector<32x64xf32>
    %cst = arith.constant dense<0.000000e+00> : vector<8x64xf32>
    %2 = tpu.matmul %0, %1, %cst {dimension_numbers = #tpu.dot_dimension_numbers<[1], [0], [0], [1], [0, 0, 1, 1], [], []>} : vector<8x32xf32>, vector<32x64xf32>, vector<8x64xf32> -> vector<8x64xf32>
    %c0_3 = arith.constant 0 : index
    %c0_4 = arith.constant 0 : index
    %3 = vector.load %arg2[%c0_3, %c0_4] : memref<1x64xf32, #tpu.memory_space<vmem>>, vector<1x64xf32>
    %4 = vector.broadcast %3 : vector<1x64xf32> to vector<8x64xf32>
    %5 = arith.addf %2, %4 : vector<8x64xf32>
    %cst_5 = arith.constant 0.000000e+00 : f32
    %6 = vector.broadcast %cst_5 : f32 to vector<8x64xf32>
    %7 = arith.maximumf %5, %6 : vector<8x64xf32>
    %c0_6 = arith.constant 0 : index
    %c0_7 = arith.constant 0 : index
    %8 = vector.load %arg3[%c0_6, %c0_7] : memref<64x16xf32, #tpu.memory_space<vmem>>, vector<64x16xf32>
    %cst_8 = arith.constant dense<0.000000e+00> : vector<8x16xf32>
    %9 = tpu.matmul %7, %8, %cst_8 {dimension_numbers = #tpu.dot_dimension_numbers<[1], [0], [0], [1], [0, 0, 1, 1], [], []>} : vector<8x64xf32>, vector<64x16xf32>, vector<8x16xf32> -> vector<8x16xf32>
    %c0_9 = arith.constant 0 : index
    %c0_10 = arith.constant 0 : index
    %10 = vector.load %arg4[%c0_9, %c0_10] : memref<1x16xf32, #tpu.memory_space<vmem>>, vector<1x16xf32>
    %11 = vector.broadcast %10 : vector<1x16xf32> to vector<8x16xf32>
    %12 = arith.addf %9, %11 : vector<8x16xf32>
    %c0_11 = arith.constant 0 : index
    %c0_12 = arith.constant 0 : index
    %13 = vector.load %arg5[%c0_11, %c0_12] : memref<8x16xf32, #tpu.memory_space<vmem>>, vector<8x16xf32>
    tpu.vector_store %arg5[%c0_11, %c0_12], %12 {strides = array<i32>} : memref<8x16xf32, #tpu.memory_space<vmem>>, vector<8x16xf32>,
    return
  }
}

</mosaic_0001>

<llo_original>
// kernel: tpu_custom_call.1
$region0: #{tpu_custom_call.1}
  #allocation0 [shape = 'u32[]', space=smem, size = 0x4, offset = 0x4, fixed_abs, tag = 'smem constant byte address 0x4 - core index']
  #allocation1 [shape = 'u32[72,128]{1,0:T(1,128)}', space=vmem, size = 0x9000, scoped, tag = 'internal scratch']
  %s0 = inlined_call_operand.vmem [shape: f32[8,32], index: 0, kind: input, shape index: {}]
  %s1 = inlined_call_operand.vmem [shape: f32[32,64], index: 1, kind: input, shape index: {}]
  %s2 = inlined_call_operand.vmem [shape: f32[1,64], index: 2, kind: input, shape index: {}]
  %s3 = inlined_call_operand.vmem [shape: f32[64,16], index: 3, kind: input, shape index: {}]
  %s4 = inlined_call_operand.vmem [shape: f32[1,16], index: 4, kind: input, shape index: {}]
  %s5 = inlined_call_operand.hbm [shape: f32[8,16], index: 5, kind: output, shape index: {}]
  %s6 = sld [smem:[#allocation0]]
  $region30: #{tpu_custom_call.1} parent=0
    _
  %s8 = ssub.s32 1, %s6
  %s9 = scalar_select 0, %s8, %s6
  $region1: #{tpu_custom_call.1} parent=0
    #allocation2 [shape = 'u8[4096]{0}', space=vmem, size = 0x1000, scoped, tag = 'output window, operand 0, single buffered']
    #allocation3 [shape = 's32[1]{0}', space=sflag, size = 0x4, scoped, tag = 'scoped memory for tpu_custom_call.1']
    %10 = vsyncpa [#allocation3], 0
    // Predicated region
    $region2: #{tpu_custom_call.1} parent=1 // pred_check
      _
    $region3: #{tpu_custom_call.1} parent=1 // pred_check_branch
      %12 = sbr.rel (0) target = $region5
    $region4: #{tpu_custom_call.1} parent=1 // pred_region
      _
    $region5: #{tpu_custom_call.1} parent=1 // pred_fallthru
      _
    // Predicated region
    $region6: #{tpu_custom_call.1} parent=1 // pred_check
      _
    $region7: #{tpu_custom_call.1} parent=1 // pred_check_branch
      %14 = sbr.rel (0) target = $region9
    $region8: #{tpu_custom_call.1} parent=1 // pred_region
      _
    $region9: #{tpu_custom_call.1} parent=1 // pred_fallthru
      _
    // Predicated region
    $region10: #{tpu_custom_call.1} parent=1 // pred_check
      _
    $region11: #{tpu_custom_call.1} parent=1 // pred_check_branch
      %16 = sbr.rel (0) target = $region13
    $region12: #{tpu_custom_call.1} parent=1 // pred_region
      _
    $region13: #{tpu_custom_call.1} parent=1 // pred_fallthru
      _
    // Predicated region
    $region14: #{tpu_custom_call.1} parent=1 // pred_check
      _
    $region15: #{tpu_custom_call.1} parent=1 // pred_check_branch
      %18 = sbr.rel (0) target = $region17
    $region16: #{tpu_custom_call.1} parent=1 // pred_region
      _
    $region17: #{tpu_custom_call.1} parent=1 // pred_fallthru
      _
    // Predicated region
    $region18: #{tpu_custom_call.1} parent=1 // pred_check
      _
    $region19: #{tpu_custom_call.1} parent=1 // pred_check_branch
      %20 = sbr.rel (0) target = $region21
    $region20: #{tpu_custom_call.1} parent=1 // pred_region
      _
    $region21: #{tpu_custom_call.1} parent=1 // pred_fallthru
      _
    %v21 = vld [vmem:[%s0] sm:$0xff]
    %v22 = vld [vmem:[%s1] sm:$0xff]
    %v23 = vld [vmem:[%s1 + $0x8] sm:$0xff]
    %v24 = vld [vmem:[%s1 + $0x10] sm:$0xff]
    %v25 = vld [vmem:[%s1 + $0x18] sm:$0xff]
    %v26 = vld [vmem:[%s2] sm:$0x1]
    %v28 = vperm.slane %v26, 0
    %vm30 = vcmask 261120
    %v32 = vsel %vm30, %v21, 0
    %34 = vmatpush.msra.mxu0 0.0
    %35 = vmatpush.msra.mxu0 0.0
    %36 = vmatpush.msra.mxu0 0.0
    %37 = vmatpush.msra.mxu0 0.0
    %38 = vmatpush.msra.mxu0 0.0
    %39 = vmatpush.msra.mxu0 0.0
    %40 = vmatpush.msra.mxu0 0.0
    %41 = vmatpush.msra.mxu0 0.0
    %42 = vmatpush.msra.mxu0 0.0
    %43 = vmatpush.msra.mxu0 0.0
    %44 = vmatpush.msra.mxu0 0.0
    %45 = vmatpush.msra.mxu0 0.0
    %46 = vmatpush.msra.mxu0 %v25
    %47 = vmatpush.msra.mxu0 %v24
    %48 = vmatpush.msra.mxu0 %v23
    %49 = vmatpush.msra.mxu0 %v22
    %50 = vmatmul.f32.gmra.mxu0 %v32
    %v51 = vpop.f32.mrf.mxu0
    %v52 = vadd.f32 %v28, %v51
    %53 = vdwg.mxu0
    %v54 = vmax.f32 %v52, 0.0
    %v55 = vld [vmem:[%s3] sm:$0xff]
    %v56 = vld [vmem:[%s3 + $0x8] sm:$0xff]
    %v57 = vld [vmem:[%s3 + $0x10] sm:$0xff]
    %v58 = vld [vmem:[%s3 + $0x18] sm:$0xff]
    %v59 = vld [vmem:[%s3 + $0x20] sm:$0xff]
    %v60 = vld [vmem:[%s3 + $0x28] sm:$0xff]
    %v61 = vld [vmem:[%s3 + $0x30] sm:$0xff]
    %v62 = vld [vmem:[%s3 + $0x38] sm:$0xff]
    %v63 = vld [vmem:[%s4] sm:$0x1]
    %v65 = vperm.slane %v63, 0
    %vm67 = vcmask 523264
    %v69 = vsel %vm67, %v54, 0
    %71 = vmatpush.msra.mxu0 0.0
    %72 = vmatpush.msra.mxu0 0.0
    %73 = vmatpush.msra.mxu0 0.0
    %74 = vmatpush.msra.mxu0 0.0
    %75 = vmatpush.msra.mxu0 0.0
    %76 = vmatpush.msra.mxu0 0.0
    %77 = vmatpush.msra.mxu0 0.0
    %78 = vmatpush.msra.mxu0 0.0
    %79 = vmatpush.msra.mxu0 %v62
    %80 = vmatpush.msra.mxu0 %v61
    %81 = vmatpush.msra.mxu0 %v60
    %82 = vmatpush.msra.mxu0 %v59
    %83 = vmatpush.msra.mxu0 %v58
    %84 = vmatpush.msra.mxu0 %v57
    %85 = vmatpush.msra.mxu0 %v56
    %86 = vmatpush.msra.mxu0 %v55
    %87 = vmatmul.f32.gmra.mxu0 %v69
    %v88 = vpop.f32.mrf.mxu0
    %v89 = vadd.f32 %v65, %v88
    %90 = vdwg.mxu0
    %vm91 = vcmask 130048
    %92 = vst.msk [vmem:[#allocation2] sm:$0xff] %vm91, %v89
    // Predicated region
    $region22: #{tpu_custom_call.1} parent=1 // pred_check
      _
    $region23: #{tpu_custom_call.1} parent=1 // pred_check_branch
      %94 = sbr.rel (0) target = $region25
    $region24: #{tpu_custom_call.1} parent=1 // pred_region
      %96 = vsyncadd [#allocation3], 0
      %s98 = sshll.u32 [#allocation2], 4
      %s99 = int_to_ptr.vmem [resolvable:$true] %s98
      %s100 = sshll.u32 %s5, 4
      %s101 = int_to_ptr.hbm [resolvable:$true] %s100
      %103 = dma.vmem_to_hbm [thread:$0]  %s99, 128, %s101, [#allocation3]
    $region25: #{tpu_custom_call.1} parent=1 // pred_fallthru
      _
    // Predicated region
    $region26: #{tpu_custom_call.1} parent=1 // pred_check
      _
    $region27: #{tpu_custom_call.1} parent=1 // pred_check_branch
      %105 = sbr.rel (0) target = $region29
    $region28: #{tpu_custom_call.1} parent=1 // pred_region
      %107 = dma.done [#allocation3], 128
    $region29: #{tpu_custom_call.1} parent=1 // pred_fallthru
      _
    %108 = vsyncpa [#allocation3], 1

</llo_original>
